<compile_context>
chip_gen: v7x
topology: tpu7x:2x2x1
jax: 0.10.0
libtpu: 0.0.40
codegen_flags: <defaults>
</compile_context>

<pallas_src>
import functools

import jax
import jax.numpy as jnp
from jax import lax
from jax.experimental import pallas as pl
from jax.experimental.pallas import tpu as pltpu

_LANE = 128
_SUBLANE = 8


def _focal_loss_kernel(x_ref, t_ref, out_ref, *, gamma, lane_dense):
    x = x_ref[...]                                   # (bn, C) native dtype
    bn, c = x.shape

    # bf16 inputs keep the wide stage in bf16 (v6e/v7x VPU/EUP are bf16
    # native, ~2x throughput); everything else runs in f32.  The narrow
    # per-row tail below is always f32.
    compute_dtype = jnp.bfloat16 if x.dtype == jnp.bfloat16 else jnp.float32
    xc = x.astype(compute_dtype)

    if lane_dense:
        t_col = jnp.transpose(t_ref[...])            # (1, bn) -> (bn, 1): cheap XLU relayout
    else:
        t_col = t_ref[...]                           # (bn, 1)

    # One-hot row mask from a lane iota == scatter(1, ids, 1.0) in the reference.
    # TODO(synk): out-of-range targets silently contribute x_t = 0 (finite but
    # wrong loss) instead of raising like torch scatter would.
    col = lax.broadcasted_iota(jnp.int32, (bn, c), 1)
    mask = col == t_col                              # (bn, C)

    # Stable logsumexp gather on shifted logits:
    #   log_p = (x[target] - m) - log(sum exp(x - m))   (no full softmax, no log(0))
    m_col = jnp.max(xc, axis=-1, keepdims=True)      # (bn, 1)
    xs = xc - m_col                                  # (bn, C), <= 0
    e = jnp.exp(xs)

    if lane_dense:
        # Lane-major (bn,) tail: full 128-lane vregs for the per-row math.
        reduce_sum = lambda v: jnp.sum(v, axis=-1, dtype=jnp.float32)
    else:
        reduce_sum = lambda v: jnp.sum(v, axis=-1, keepdims=True, dtype=jnp.float32)

    # TODO(synk): on v7x the sum-of-exp could go to the idle MXU via a
    # dot-with-ones instead of a cross-lane reduce.
    s = reduce_sum(e)                                # sum exp(x - m) >= 1
    x_t = reduce_sum(jnp.where(mask, xs, 0))         # x[target] - m
    log_p = x_t - jnp.log(s)                         # finite, <= 0
    p = jnp.exp(log_p)
    one_minus_p = jnp.maximum(1.0 - p, 0.0)

    # (1 - p)^gamma without a float-exponent power for the common integer case.
    g = float(gamma)
    if g.is_integer() and g >= 0:
        focal = jnp.ones_like(one_minus_p)
        for _ in range(int(g)):                      # trace-time unrolled multiplies
            focal = focal * one_minus_p
    else:
        # TODO(synk): negative gamma would give inf at p == 1; spec says gamma > 0.
        focal = jnp.exp(jnp.float32(g) * jnp.log(one_minus_p))

    loss = -focal * log_p
    if lane_dense:
        out_ref[...] = loss[None, :].astype(out_ref.dtype)   # (1, bn) row
    else:
        out_ref[...] = loss.astype(out_ref.dtype)            # (bn, 1) column


def _vmem_limit_bytes():
    # ~3/4 of physical per-core VMEM: ~96 MiB on v5e/v6e (128 MiB physical),
    # ~48 MiB on v7x (64 MiB physical).  Conservative fallback if the query fails.
    try:
        cap = int(pltpu.get_tpu_info().vmem_capacity_bytes)
    except Exception:
        cap = 64 * 1024 * 1024
    return (cap * 3) // 4


def _choose_block_n(n, c, in_itemsize, vmem_limit):
    """Rows per grid step: budget the double-buffered logits tile PLUS the
    in-kernel full-width temporaries and lane-padded columns, aiming for
    multi-MiB logits tiles so the ~0.35 us per-grid-step overhead amortizes."""
    budget = (vmem_limit * 2) // 3                   # headroom for out buffers / compiler scratch
    per_row = (
        2 * c * in_itemsize                          # double-buffered logits DMA tile
        + 4 * c * 4                                  # full-width temporaries (iota/mask, x - m, exp, where)
        + 2 * _LANE * 4                              # lane-padded (bn, 1) columns (row max, targets)
        + 8 * _SUBLANE * 4                           # lane-major (bn,) per-row tail temporaries
    )
    return max(int(budget // per_row), 1)


def focal_loss(inputs, targets, gamma=2, size_average=True, reduce=False):
    """inputs: (N, C) float, targets: (N,) int.  Returns the (N, 1) batch loss,
    or a scalar if reduce=True (mean/sum per size_average), matching the
    PyTorch FocalLoss.forward semantics."""
    n, c = inputs.shape
    vmem_limit = _vmem_limit_bytes()
    block_n = _choose_block_n(n, c, jnp.dtype(inputs.dtype).itemsize, vmem_limit)

    compiler_params = pltpu.CompilerParams(
        dimension_semantics=("parallel",),
        vmem_limit_bytes=vmem_limit,
    )

    if block_n >= n or block_n >= _LANE:
        # Lane-dense layout: (1, N) targets in, (1, N) loss out.
        if block_n >= n:
            block_n = n                               # single step; blocks == full arrays
        else:
            block_n = (block_n // _LANE) * _LANE      # lane-dense blocks need a 128-multiple
        t_in = targets.astype(jnp.int32).reshape(1, n)
        out = pl.pallas_call(
            functools.partial(_focal_loss_kernel, gamma=gamma, lane_dense=True),
            out_shape=jax.ShapeDtypeStruct((1, n), jnp.float32),
            grid=(pl.cdiv(n, block_n),),
            in_specs=[
                pl.BlockSpec((block_n, c), lambda i: (i, 0)),
                pl.BlockSpec((1, block_n), lambda i: (0, i)),
            ],
            out_specs=pl.BlockSpec((1, block_n), lambda i: (0, i)),
            compiler_params=compiler_params,
        )(inputs, t_in)
        batch_loss = out.reshape(n, 1)
    else:
        # Huge-C fallback: only a handful of rows fit per tile, so lane-dense
        # (1, block_n) blocks are not expressible; padded (N, 1) target/output
        # traffic is negligible next to the logits reads in this regime.
        # TODO(synk): for vocab-scale C, add a second "arbitrary" class-grid
        # axis with streaming logsumexp accumulators instead of one-shot rows.
        block_n = max(_SUBLANE, (block_n // _SUBLANE) * _SUBLANE)
        t_in = targets.astype(jnp.int32).reshape(n, 1)
        batch_loss = pl.pallas_call(
            functools.partial(_focal_loss_kernel, gamma=gamma, lane_dense=False),
            out_shape=jax.ShapeDtypeStruct((n, 1), jnp.float32),
            grid=(pl.cdiv(n, block_n),),
            in_specs=[
                pl.BlockSpec((block_n, c), lambda i: (i, 0)),
                pl.BlockSpec((block_n, 1), lambda i: (i, 0)),
            ],
            out_specs=pl.BlockSpec((block_n, 1), lambda i: (i, 0)),
            compiler_params=compiler_params,
        )(inputs, t_in)

    if reduce:
        return batch_loss.mean() if size_average else batch_loss.sum()
    return batch_loss


if __name__ == "__main__":
    key = jax.random.PRNGKey(0)
    k_x, k_t = jax.random.split(key)

    N, C = 8, 32                                   # class_num = 32
    x = jax.random.normal(k_x, (N, C), dtype=jnp.float32)
    targets = jax.random.randint(k_t, (N,), 0, C, dtype=jnp.int32)

    out = focal_loss(x, targets, gamma=2)
    jax.block_until_ready(out)

    # Pure-JAX reference check.
    log_p_ref = jnp.take_along_axis(jax.nn.log_softmax(x, axis=-1),
                                    targets[:, None], axis=1)
    p_ref = jnp.exp(log_p_ref)
    ref = -((1.0 - p_ref) ** 2) * log_p_ref
    assert out.shape == (N, 1)
    assert jnp.allclose(out, ref, rtol=1e-5, atol=1e-5)

    print("KERNEL_OK")
</pallas_src>

<mosaic_0001>
module attributes {stable_mosaic.version = 11 : i64} {
  func.func @_focal_loss_kernel(%arg0: i32, %arg1: memref<8x32xf32, #tpu.memory_space<vmem>>, %arg2: memref<1x8xi32, #tpu.memory_space<vmem>>, %arg3: memref<1x8xf32, #tpu.memory_space<vmem>>) attributes {dimension_semantics = [#tpu.dimension_semantics<parallel>], iteration_bounds = array<i64: 1>, scalar_prefetch = 0 : i64, scratch_operands = 0 : i64, tpu.core_type = #tpu.core_type<tc>, window_params = [{transform_indices = @transform_0, window_bounds = array<i64: 8, 32>}, {transform_indices = @transform_1, window_bounds = array<i64: 1, 8>}, {transform_indices = @transform_2, window_bounds = array<i64: 1, 8>}]} {
    %c0 = arith.constant 0 : index
    %c0_0 = arith.constant 0 : index
    %0 = vector.load %arg1[%c0, %c0_0] : memref<8x32xf32, #tpu.memory_space<vmem>>, vector<8x32xf32>
    %c0_1 = arith.constant 0 : index
    %c0_2 = arith.constant 0 : index
    %1 = vector.load %arg2[%c0_1, %c0_2] : memref<1x8xi32, #tpu.memory_space<vmem>>, vector<1x8xi32>
    %2 = tpu.transpose %1, [1, 0] : vector<1x8xi32> -> vector<8x1xi32>
    %3 = tpu.iota {dimensions = array<i32: 1>} : vector<8x32xi32>
    %4 = vector.broadcast %2 : vector<8x1xi32> to vector<8x32xi32>
    %5 = arith.cmpi eq, %3, %4 : vector<8x32xi32>
    %cst = arith.constant dense<0xFF800000> : vector<8xf32>
    %6 = vector.multi_reduction <maximumf>, %0, %cst [1] : vector<8x32xf32> to vector<8xf32>
    %7 = vector.shape_cast %6 : vector<8xf32> to vector<8x1xf32>
    %8 = vector.broadcast %7 : vector<8x1xf32> to vector<8x32xf32>
    %9 = arith.subf %0, %8 : vector<8x32xf32>
    %10 = math.exp %9 : vector<8x32xf32>
    %cst_3 = arith.constant dense<0.000000e+00> : vector<8xf32>
    %11 = vector.multi_reduction <add>, %10, %cst_3 [1] : vector<8x32xf32> to vector<8xf32>
    %c0_i32 = arith.constant 0 : i32
    %12 = arith.sitofp %c0_i32 : i32 to f32
    %13 = vector.broadcast %12 : f32 to vector<8x32xf32>
    %14 = arith.select %5, %9, %13 : vector<8x32xi1>, vector<8x32xf32>
    %cst_4 = arith.constant dense<0.000000e+00> : vector<8xf32>
    %15 = vector.multi_reduction <add>, %14, %cst_4 [1] : vector<8x32xf32> to vector<8xf32>
    %16 = math.log %11 : vector<8xf32>
    %17 = arith.subf %15, %16 : vector<8xf32>
    %18 = math.exp %17 : vector<8xf32>
    %cst_5 = arith.constant 1.000000e+00 : f32
    %19 = vector.broadcast %cst_5 : f32 to vector<8xf32>
    %20 = arith.subf %19, %18 : vector<8xf32>
    %cst_6 = arith.constant 0.000000e+00 : f32
    %21 = vector.broadcast %cst_6 : f32 to vector<8xf32>
    %22 = arith.maximumf %20, %21 : vector<8xf32>
    %cst_7 = arith.constant 1.000000e+00 : f32
    %23 = vector.broadcast %cst_7 : f32 to vector<8xf32>
    %24 = arith.mulf %23, %22 : vector<8xf32>
    %25 = arith.mulf %24, %22 : vector<8xf32>
    %cst_8 = arith.constant 0.000000e+00 : f32
    %26 = vector.broadcast %cst_8 : f32 to vector<8xf32>
    %27 = arith.subf %26, %25 : vector<8xf32>
    %28 = arith.mulf %27, %17 : vector<8xf32>
    %29 = vector.shape_cast %28 : vector<8xf32> to vector<1x8xf32>
    %c0_9 = arith.constant 0 : index
    %c0_10 = arith.constant 0 : index
    %30 = vector.load %arg3[%c0_9, %c0_10] : memref<1x8xf32, #tpu.memory_space<vmem>>, vector<1x8xf32>
    tpu.vector_store %arg3[%c0_9, %c0_10], %29 {strides = array<i32>} : memref<1x8xf32, #tpu.memory_space<vmem>>, vector<1x8xf32>,
    return
  }
  func.func @transform_0(%arg0: i32) -> (i32, i32) {
    %c0_i32 = arith.constant 0 : i32
    %c0_i32_0 = arith.constant 0 : i32
    return %arg0, %c0_i32 : i32, i32
  }
  func.func @transform_1(%arg0: i32) -> (i32, i32) {
    %c0_i32 = arith.constant 0 : i32
    %c0_i32_0 = arith.constant 0 : i32
    return %c0_i32, %arg0 : i32, i32
  }
  func.func @transform_2(%arg0: i32) -> (i32, i32) {
    %c0_i32 = arith.constant 0 : i32
    %c0_i32_0 = arith.constant 0 : i32
    return %c0_i32, %arg0 : i32, i32
  }
}

</mosaic_0001>

<llo_original>
// kernel: tpu_custom_call.1
$region0: #{tpu_custom_call.1}
  #allocation0 [shape = 'u32[]', space=smem, size = 0x4, offset = 0x4, fixed_abs, tag = 'smem constant byte address 0x4 - core index']
  #allocation1 [shape = 'u32[144,128]{1,0:T(1,128)}', space=vmem, size = 0x12000, scoped, tag = 'internal scratch']
  %s0 = inlined_call_operand.hbm [shape: f32[8,32], index: 0, kind: input, shape index: {}]
  %s1 = inlined_call_operand.vmem [shape: s32[1,8], index: 1, kind: input, shape index: {}]
  %s2 = inlined_call_operand.hbm [shape: f32[1,8], index: 2, kind: output, shape index: {}]
  %s3 = sld [smem:[#allocation0]]
  $region22: #{tpu_custom_call.1} parent=0
    _
  %s5 = ssub.s32 1, %s3
  %s6 = scalar_select 0, %s5, %s3
  $region1: #{tpu_custom_call.1} parent=0
    #allocation2 [shape = 'u8[4096]{0}', space=vmem, size = 0x1000, scoped, tag = 'input window, operand 0, single buffered']
    #allocation3 [shape = 's32[1]{0}', space=sflag, size = 0x4, scoped, tag = 'scoped memory for tpu_custom_call.1']
    #allocation4 [shape = 's32[1]{0}', space=sflag, size = 0x4, scoped, tag = 'scoped memory for tpu_custom_call.1']
    #allocation5 [shape = 'u8[512]{0}', space=vmem, size = 0x400, scoped, tag = 'output window, operand 0, single buffered']
    %7 = vsyncpa [#allocation3], 0
    %8 = vsyncpa [#allocation4], 0
    // Predicated region
    $region2: #{tpu_custom_call.1} parent=1 // pred_check
      _
    $region3: #{tpu_custom_call.1} parent=1 // pred_check_branch
      %10 = sbr.rel (0) target = $region5
    $region4: #{tpu_custom_call.1} parent=1 // pred_region
      %s12 = ssub.s32 128, 128
      %13 = vsyncadd [#allocation3], %s12
      %s15 = sshll.u32 [#allocation2], 4
      %s16 = int_to_ptr.vmem [resolvable:$true] %s15
      %18 = dma.hbm_to_vmem [thread:$0]  %s0, 128, %s16, [#allocation3]
    $region5: #{tpu_custom_call.1} parent=1 // pred_fallthru
      _
    // Predicated region
    $region6: #{tpu_custom_call.1} parent=1 // pred_check
      _
    $region7: #{tpu_custom_call.1} parent=1 // pred_check_branch
      %20 = sbr.rel (0) target = $region9
    $region8: #{tpu_custom_call.1} parent=1 // pred_region
      _
    $region9: #{tpu_custom_call.1} parent=1 // pred_fallthru
      _
    // Predicated region
    $region10: #{tpu_custom_call.1} parent=1 // pred_check
      _
    $region11: #{tpu_custom_call.1} parent=1 // pred_check_branch
      %22 = sbr.rel (0) target = $region13
    $region12: #{tpu_custom_call.1} parent=1 // pred_region
      %23 = dma.done [#allocation3], 128
    $region13: #{tpu_custom_call.1} parent=1 // pred_fallthru
      _
    %v24 = vld [vmem:[#allocation2] sm:$0xff]
    %v25 = vld [vmem:[%s1] sm:$0x1]
    %26 = vxpose.xlu0.b32.start [1/16] %v25, 128
    %27 = vxpose.xlu0.b32.cont [2/16] 0, 128
    %28 = vxpose.xlu0.b32.cont [3/16] 0, 128
    %29 = vxpose.xlu0.b32.cont [4/16] 0, 128
    %30 = vxpose.xlu0.b32.cont [5/16] 0, 128
    %31 = vxpose.xlu0.b32.cont [6/16] 0, 128
    %32 = vxpose.xlu0.b32.cont [7/16] 0, 128
    %33 = vxpose.xlu0.b32.cont [8/16] 0, 128
    %34 = vxpose.xlu0.b32.cont [9/16] 0, 128
    %35 = vxpose.xlu0.b32.cont [10/16] 0, 128
    %36 = vxpose.xlu0.b32.cont [11/16] 0, 128
    %37 = vxpose.xlu0.b32.cont [12/16] 0, 128
    %38 = vxpose.xlu0.b32.cont [13/16] 0, 128
    %39 = vxpose.xlu0.b32.cont [14/16] 0, 128
    %40 = vxpose.xlu0.b32.cont [15/16] 0, 128
    %41 = vxpose.xlu0.b32.end [16/16] 0, 128
    %v42 = vpop.trf.xlu0
    %v43 = vpop.trf.xlu0
    %v44 = vpop.trf.xlu0
    %v45 = vpop.trf.xlu0
    %v46 = vpop.trf.xlu0
    %v47 = vpop.trf.xlu0
    %v48 = vpop.trf.xlu0
    %v49 = vpop.trf.xlu0
    %v50 = vpop.trf.xlu0
    %v51 = vpop.trf.xlu0
    %v52 = vpop.trf.xlu0
    %v53 = vpop.trf.xlu0
    %v54 = vpop.trf.xlu0
    %v55 = vpop.trf.xlu0
    %v56 = vpop.trf.xlu0
    %v57 = vpop.trf.xlu0
    %v58 = vlaneseq
    %v59 = vand.u32 %v58, 127
    %60 = vset.pattern.permute.xlu0 0
    %61 = vperm.xlu0 %60, %v42
    %v62 = vpop.permute.xlu0 %61
    %vm63 = vcmp.eq.s32.totalorder %v59, %v62
    %vm64 = vcmask 261120
    %v65 = vsel %vm64, %v24, -inf
    %66 = vmax.xlane.f32.xlu0 %v65
    %v67 = vpop.xlane.xlu0 %66
    %v68 = vsub.f32 %v24, %v67
    %v69 = vmul.f32 %v68, 1.442695
    %v70 = vpow.pop %v69
    %v71 = vsel %vm64, %v70, 0.0
    %72 = vadd.xlane.f32.xlu0 %v71
    %v73 = vpop.xlane.xlu0 %72
    %v74 = vsel %vm63, %v68, 0.0
    %v75 = vsel %vm64, %v74, 0.0
    %76 = vadd.xlane.f32.xlu0 %v75
    %v77 = vpop.xlane.xlu0 %76
    %v78 = vlog2.pop %v73
    %v79 = vmul.f32 %v78, 0.6931472
    %v80 = vsub.f32 %v77, %v79
    %v81 = vmul.f32 %v80, 1.442695
    %v82 = vpow.pop %v81
    %v83 = vsub.f32 1.0, %v82
    %v84 = vmax.f32 %v83, 0.0
    %v85 = vmul.f32 %v84, %v84
    %v86 = vsub.f32 0.0, %v85
    %v87 = vmul.f32 %v86, %v80
    %v89 = vlaneseq
    %v90 = vshrl.u32 %v89, 7
    %v91 = vsub.s32 %v59, %v90
    %v92 = vrot.slane %v87, %v91
    %vm94 = vcmask 57344
    %95 = vst.msk [vmem:[#allocation5] sm:$0x1] %vm94, %v92
    // Predicated region
    $region14: #{tpu_custom_call.1} parent=1 // pred_check
      _
    $region15: #{tpu_custom_call.1} parent=1 // pred_check_branch
      %97 = sbr.rel (0) target = $region17
    $region16: #{tpu_custom_call.1} parent=1 // pred_region
      %s99 = ssub.s32 16, 16
      %100 = vsyncadd [#allocation4], %s99
      %s102 = sshll.u32 [#allocation5], 4
      %s103 = int_to_ptr.vmem [resolvable:$true] %s102
      %105 = dma.vmem_to_hbm [thread:$0]  %s103, 16, %s2, [#allocation4]
    $region17: #{tpu_custom_call.1} parent=1 // pred_fallthru
      _
    // Predicated region
    $region18: #{tpu_custom_call.1} parent=1 // pred_check
      _
    $region19: #{tpu_custom_call.1} parent=1 // pred_check_branch
      %107 = sbr.rel (0) target = $region21
    $region20: #{tpu_custom_call.1} parent=1 // pred_region
      %108 = dma.done [#allocation4], 16
    $region21: #{tpu_custom_call.1} parent=1 // pred_fallthru
      _
    %109 = vsyncpa [#allocation3], 1
    %110 = vsyncpa [#allocation4], 1

</llo_original>
